<compile_context>
chip_gen: v7x
topology: tpu7x:2x2x1
jax: 0.10.0
libtpu: 0.0.40
codegen_flags: <defaults>
</compile_context>

<pallas_src>
import functools

import jax
import jax.numpy as jnp
from jax import lax
from jax.experimental import pallas as pl
from jax.experimental.pallas import tpu as pltpu


def _criterion_tile_kernel(logits_ref, tgt_ref, out_ref, *, num_classes, eos_coef):
    """One (tb, tq, C1) block: emit a (tb, 8, 128) slab of per-batch partials.

    Sublane rows of the slab (lane 0 carries the value, rest is zero-fill):
      row 0: sum of -w_t * log_softmax(logits)[tgt]   (weighted CE numerator)
      row 1: sum of w_t                               (weighted CE denominator)
      row 2: number of queries predicted as a real class
      row 3: number of target (non-"no object") queries
    """
    # Upcast immediately after load (bf16 inputs OK; all math stays f32).
    logits = logits_ref[...].astype(jnp.float32)          # (tb, tq, C1)
    tgt = tgt_ref[...]                                      # (tb, tq, 1) int32
    tb, tq, c1 = logits.shape

    cls_ids = lax.broadcasted_iota(jnp.int32, (tb, tq, c1), 2)

    # ---- fused row max (log-softmax + cardinality share it) -----------------
    # "no object" is the LAST class column -> static lane slice, no reduce.
    real_masked = jnp.where(cls_ids < num_classes, logits, jnp.float32(-1e30))
    real_max = jnp.max(real_masked, axis=-1, keepdims=True)        # lane reduce 1
    empty_col = logits[:, :, num_classes:num_classes + 1]          # (tb, tq, 1)
    row_max = jnp.maximum(real_max, empty_col)

    # ---- log-softmax (numerically stable) -----------------------------------
    shifted = logits - row_max
    sum_exp = jnp.sum(jnp.exp(shifted), axis=-1, keepdims=True)    # lane reduce 2
    lse = jnp.log(sum_exp)

    # ---- weighted cross-entropy (loss_labels) --------------------------------
    # log p(target) = shifted[tgt] - lse ; gather via masked lane sum.
    shifted_t = jnp.sum(jnp.where(cls_ids == tgt, shifted, jnp.float32(0.0)),
                        axis=-1, keepdims=True)                    # lane reduce 3
    logp_t = shifted_t - lse                                       # (tb, tq, 1)

    is_no_obj = tgt == num_classes
    w_t = jnp.where(is_no_obj, jnp.float32(eos_coef), jnp.float32(1.0))

    loss_sum = jnp.sum(-w_t * logp_t, axis=1, keepdims=True)       # (tb, 1, 1)
    weight_sum = jnp.sum(w_t, axis=1, keepdims=True)               # (tb, 1, 1)

    # ---- cardinality error (loss_cardinality) --------------------------------
    # argmax != num_classes  <=>  max over real classes >= no-object logit.
    # Ties resolve to the lower index (a real class), matching torch argmax,
    # ONLY because "no object" is the last class index.
    pred_not_empty = jnp.where(real_max >= empty_col,
                               jnp.float32(1.0), jnp.float32(0.0))
    card_pred = jnp.sum(pred_not_empty, axis=1, keepdims=True)     # (tb, 1, 1)
    n_tgt = jnp.sum(jnp.where(is_no_obj, jnp.float32(0.0), jnp.float32(1.0)),
                    axis=1, keepdims=True)                         # (tb, 1, 1)

    # ---- write this step's partial slab (no resident accumulator) ------------
    sub = lax.broadcasted_iota(jnp.int32, (tb, 8, 128), 1)
    out_ref[...] = jnp.where(sub == 0, loss_sum,
                   jnp.where(sub == 1, weight_sum,
                   jnp.where(sub == 2, card_pred,
                   jnp.where(sub == 3, n_tgt, jnp.float32(0.0)))))


def _pick_tiles(B, Q, C1, itemsize, budget_bytes=16 << 20, tq_cap=1024):
    """Pick (tb, tq): as much work per grid step as the VMEM budget allows.

    - Sublane multiple is dtype-aware (8 for f32, 16 for bf16, 32 for 1-byte).
    - The last-two block dims are either (tq multiple of `sub`, full C1) or the
      full (Q, C1) extents, so the (8,128) constraint is always satisfied.
    - Budget counts ~(2-3 input buffers + ~6 full-tile f32 temporaries).
    """
    sub = max(8, 32 // max(1, itemsize))
    c1_pad = ((C1 + 127) // 128) * 128          # lane padding inside VMEM
    est = lambda tb, tq: tb * tq * c1_pad * 4 * 10

    tq = Q                                       # full extent is always legal
    if Q % sub == 0:
        start = (min(tq_cap, Q) // sub) * sub
        for t in range(start, sub - 1, -sub):
            if Q % t == 0 and est(1, t) <= budget_bytes:
                tq = t
                break

    tb = 1
    for t in range(B, 0, -1):
        if B % t == 0 and est(t, tq) <= budget_bytes:
            tb = t
            break
    return tb, tq


def _logits_block_spec(tb, tq, C1, nqt):
    """Logits BlockSpec; deeper prefetch only when many q-tiles stream."""
    idx = lambda bi, qi: (bi, qi, 0)
    if nqt >= 3:
        try:
            # 3-deep pipelining hides DMA latency on v5e when step compute is
            # short; harmless on v6e/v7x (tiles are small vs. VMEM).
            return pl.BlockSpec((tb, tq, C1), idx, pipeline_mode=pl.Buffered(3))
        except (TypeError, AttributeError):
            pass
    return pl.BlockSpec((tb, tq, C1), idx)


class SetCriterionPallas:
    """JAX/Pallas counterpart of DETR's SetCriterion (concrete parts only)."""

    def __init__(self, num_classes, eos_coef, *, vmem_budget_bytes=16 << 20,
                 tq_cap=1024):
        self.num_classes = num_classes
        self.eos_coef = float(eos_coef)
        self.vmem_budget_bytes = vmem_budget_bytes
        self.tq_cap = tq_cap
        # Kept for parity with the torch module's registered buffer (and the
        # pure-JAX reference); the kernel itself only needs eos_coef.
        empty_weight = jnp.ones((num_classes + 1,), jnp.float32)
        self.empty_weight = empty_weight.at[-1].set(eos_coef)

    def __call__(self, pred_logits, target_classes):
        """pred_logits: [B, Q, num_classes+1] (f32 or bf16 — bf16 recommended on
        v5e/v6e to halve HBM traffic); target_classes: [B, Q] int."""
        B, Q, C1 = pred_logits.shape
        assert C1 == self.num_classes + 1

        itemsize = jnp.dtype(pred_logits.dtype).itemsize
        tb, tq = _pick_tiles(B, Q, C1, itemsize,
                             budget_bytes=self.vmem_budget_bytes,
                             tq_cap=self.tq_cap)
        nbt, nqt = B // tb, Q // tq
        tgt3 = target_classes.astype(jnp.int32).reshape(B, Q, 1)

        kernel = functools.partial(
            _criterion_tile_kernel,
            num_classes=self.num_classes,
            eos_coef=self.eos_coef,
        )

        partials = pl.pallas_call(
            kernel,
            grid=(nbt, nqt),
            in_specs=[
                _logits_block_spec(tb, tq, C1, nqt),
                pl.BlockSpec((tb, tq, 1), lambda bi, qi: (bi, qi, 0)),
            ],
            # Per-(batch-tile, q-tile) partial slabs; no accumulation across the
            # grid -> both axes can be "parallel" (v7x dual-TC even when B == 1).
            out_specs=pl.BlockSpec((tb, 8, 128), lambda bi, qi: (bi, qi, 0)),
            out_shape=jax.ShapeDtypeStruct((B, nqt * 8, 128), jnp.float32),
            compiler_params=pltpu.CompilerParams(
                dimension_semantics=("parallel", "parallel"),
                vmem_limit_bytes=32 * 1024 * 1024,
            ),
        )(pred_logits, tgt3)

        per_b = partials.reshape(B, nqt, 8, 128).sum(axis=1)   # (B, 8, 128)
        loss_sum = per_b[:, 0, 0]
        weight_sum = per_b[:, 1, 0]
        card_pred = per_b[:, 2, 0]
        n_tgt = per_b[:, 3, 0]

        loss_ce = jnp.sum(loss_sum) / jnp.sum(weight_sum)   # torch weighted mean
        card_err = jnp.mean(jnp.abs(card_pred - n_tgt))
        return {"loss_ce": loss_ce, "cardinality_error": card_err}


def _reference(pred_logits, target_classes, empty_weight, num_classes):
    """Pure-JAX reference for verification."""
    logits = pred_logits.astype(jnp.float32)
    logp = jax.nn.log_softmax(logits, axis=-1)
    onehot = jax.nn.one_hot(target_classes, num_classes + 1, dtype=jnp.float32)
    logp_t = jnp.sum(onehot * logp, axis=-1)
    w_t = empty_weight[target_classes]
    loss_ce = jnp.sum(-w_t * logp_t) / jnp.sum(w_t)
    card_pred = jnp.sum(jnp.argmax(logits, axis=-1) != num_classes, axis=-1)
    n_tgt = jnp.sum(target_classes != num_classes, axis=-1)
    card_err = jnp.mean(jnp.abs(card_pred.astype(jnp.float32) - n_tgt.astype(jnp.float32)))
    return loss_ce, card_err


def _check(criterion, pred_logits, target_classes, num_classes):
    losses = criterion(pred_logits, target_classes)
    jax.block_until_ready(losses)
    ref_ce, ref_card = _reference(
        pred_logits, target_classes, criterion.empty_weight, num_classes)
    assert jnp.allclose(losses["loss_ce"], ref_ce, atol=1e-5, rtol=1e-5)
    assert jnp.allclose(losses["cardinality_error"], ref_card, atol=1e-5, rtol=1e-5)


if __name__ == "__main__":
    num_classes = 4          # real classes; class index 4 == "no object"
    eos_coef = 0.1

    key = jax.random.PRNGKey(0)
    k_logits, k_tgt, k_logits2, k_tgt2 = jax.random.split(key, 4)

    # ---- test 1: f32, small shapes (collapses to a single grid step) --------
    B, Q = 2, 8
    pred_logits = jax.random.normal(k_logits, (B, Q, num_classes + 1), jnp.float32)
    target_classes = jax.random.randint(k_tgt, (B, Q), 0, num_classes + 2, jnp.int32)
    target_classes = jnp.minimum(target_classes, num_classes)

    criterion = SetCriterionPallas(num_classes, eos_coef)
    _check(criterion, pred_logits, target_classes, num_classes)

    # ---- test 2: bf16 ingest (HBM-halving path; in-kernel math stays f32) ---
    _check(criterion, pred_logits.astype(jnp.bfloat16), target_classes, num_classes)

    # ---- test 3: forced multi-step tiling (exercises the (nbt, nqt) grid,
    #              per-tile partials and the Buffered(3) prefetch path) -------
    B2, Q2 = 4, 32
    pred_logits2 = jax.random.normal(k_logits2, (B2, Q2, num_classes + 1), jnp.float32)
    target_classes2 = jax.random.randint(k_tgt2, (B2, Q2), 0, num_classes + 2, jnp.int32)
    target_classes2 = jnp.minimum(target_classes2, num_classes)

    criterion_tiled = SetCriterionPallas(
        num_classes, eos_coef, vmem_budget_bytes=64 * 1024, tq_cap=8)
    _check(criterion_tiled, pred_logits2, target_classes2, num_classes)

    print("KERNEL_OK")
</pallas_src>

<mosaic_0001>
module attributes {stable_mosaic.version = 11 : i64} {
  func.func @_criterion_tile_kernel(%arg0: i32, %arg1: i32, %arg2: memref<2x8x5xf32, #tpu.memory_space<vmem>>, %arg3: memref<2x8x1xi32, #tpu.memory_space<vmem>>, %arg4: memref<2x8x128xf32, #tpu.memory_space<vmem>>) attributes {dimension_semantics = [#tpu.dimension_semantics<parallel>, #tpu.dimension_semantics<parallel>], iteration_bounds = array<i64: 1, 1>, scalar_prefetch = 0 : i64, scratch_operands = 0 : i64, tpu.core_type = #tpu.core_type<tc>, window_params = [{transform_indices = @transform_0, window_bounds = array<i64: 2, 8, 5>}, {transform_indices = @transform_1, window_bounds = array<i64: 2, 8, 1>}, {transform_indices = @transform_2, window_bounds = array<i64: 2, 8, 128>}]} {
    %c0 = arith.constant 0 : index
    %c0_0 = arith.constant 0 : index
    %c0_1 = arith.constant 0 : index
    %0 = vector.load %arg2[%c0, %c0_0, %c0_1] : memref<2x8x5xf32, #tpu.memory_space<vmem>>, vector<2x8x5xf32>
    %c0_2 = arith.constant 0 : index
    %c0_3 = arith.constant 0 : index
    %c0_4 = arith.constant 0 : index
    %1 = vector.load %arg3[%c0_2, %c0_3, %c0_4] : memref<2x8x1xi32, #tpu.memory_space<vmem>>, vector<2x8x1xi32>
    %2 = tpu.iota {dimensions = array<i32: 2>} : vector<2x8x5xi32>
    %c4_i32 = arith.constant 4 : i32
    %3 = vector.broadcast %c4_i32 : i32 to vector<2x8x5xi32>
    %4 = arith.cmpi slt, %2, %3 : vector<2x8x5xi32>
    %cst = arith.constant -1.000000e+30 : f32
    %5 = vector.broadcast %cst : f32 to vector<2x8x5xf32>
    %6 = arith.select %4, %0, %5 : vector<2x8x5xi1>, vector<2x8x5xf32>
    %cst_5 = arith.constant dense<0xFF800000> : vector<2x8xf32>
    %7 = vector.multi_reduction <maximumf>, %6, %cst_5 [2] : vector<2x8x5xf32> to vector<2x8xf32>
    %8 = vector.shape_cast %7 : vector<2x8xf32> to vector<2x8x1xf32>
    %9 = vector.extract_strided_slice %0 {offsets = [0, 0, 4], sizes = [2, 8, 1], strides = [1, 1, 1]} : vector<2x8x5xf32> to vector<2x8x1xf32>
    %10 = arith.maximumf %8, %9 : vector<2x8x1xf32>
    %11 = vector.broadcast %10 : vector<2x8x1xf32> to vector<2x8x5xf32>
    %12 = arith.subf %0, %11 : vector<2x8x5xf32>
    %13 = math.exp %12 : vector<2x8x5xf32>
    %cst_6 = arith.constant dense<0.000000e+00> : vector<2x8xf32>
    %14 = vector.multi_reduction <add>, %13, %cst_6 [2] : vector<2x8x5xf32> to vector<2x8xf32>
    %15 = vector.shape_cast %14 : vector<2x8xf32> to vector<2x8x1xf32>
    %16 = math.log %15 : vector<2x8x1xf32>
    %17 = vector.broadcast %1 : vector<2x8x1xi32> to vector<2x8x5xi32>
    %18 = arith.cmpi eq, %2, %17 : vector<2x8x5xi32>
    %cst_7 = arith.constant 0.000000e+00 : f32
    %19 = vector.broadcast %cst_7 : f32 to vector<2x8x5xf32>
    %20 = arith.select %18, %12, %19 : vector<2x8x5xi1>, vector<2x8x5xf32>
    %cst_8 = arith.constant dense<0.000000e+00> : vector<2x8xf32>
    %21 = vector.multi_reduction <add>, %20, %cst_8 [2] : vector<2x8x5xf32> to vector<2x8xf32>
    %22 = vector.shape_cast %21 : vector<2x8xf32> to vector<2x8x1xf32>
    %23 = arith.subf %22, %16 : vector<2x8x1xf32>
    %c4_i32_9 = arith.constant 4 : i32
    %24 = vector.broadcast %c4_i32_9 : i32 to vector<2x8x1xi32>
    %25 = arith.cmpi eq, %1, %24 : vector<2x8x1xi32>
    %cst_10 = arith.constant 1.000000e-01 : f32
    %cst_11 = arith.constant 1.000000e+00 : f32
    %26 = vector.broadcast %cst_10 : f32 to vector<2x8x1xf32>
    %27 = vector.broadcast %cst_11 : f32 to vector<2x8x1xf32>
    %28 = arith.select %25, %26, %27 : vector<2x8x1xi1>, vector<2x8x1xf32>
    %cst_12 = arith.constant 0.000000e+00 : f32
    %29 = vector.broadcast %cst_12 : f32 to vector<2x8x1xf32>
    %30 = arith.subf %29, %28 : vector<2x8x1xf32>
    %31 = arith.mulf %30, %23 : vector<2x8x1xf32>
    %cst_13 = arith.constant dense<0.000000e+00> : vector<2x1xf32>
    %32 = vector.multi_reduction <add>, %31, %cst_13 [1] : vector<2x8x1xf32> to vector<2x1xf32>
    %33 = vector.shape_cast %32 : vector<2x1xf32> to vector<2x1x1xf32>
    %cst_14 = arith.constant dense<0.000000e+00> : vector<2x1xf32>
    %34 = vector.multi_reduction <add>, %28, %cst_14 [1] : vector<2x8x1xf32> to vector<2x1xf32>
    %35 = vector.shape_cast %34 : vector<2x1xf32> to vector<2x1x1xf32>
    %36 = arith.cmpf oge, %8, %9 : vector<2x8x1xf32>
    %cst_15 = arith.constant 1.000000e+00 : f32
    %cst_16 = arith.constant 0.000000e+00 : f32
    %37 = vector.broadcast %cst_15 : f32 to vector<2x8x1xf32>
    %38 = vector.broadcast %cst_16 : f32 to vector<2x8x1xf32>
    %39 = arith.select %36, %37, %38 : vector<2x8x1xi1>, vector<2x8x1xf32>
    %cst_17 = arith.constant dense<0.000000e+00> : vector<2x1xf32>
    %40 = vector.multi_reduction <add>, %39, %cst_17 [1] : vector<2x8x1xf32> to vector<2x1xf32>
    %41 = vector.shape_cast %40 : vector<2x1xf32> to vector<2x1x1xf32>
    %cst_18 = arith.constant 0.000000e+00 : f32
    %cst_19 = arith.constant 1.000000e+00 : f32
    %42 = vector.broadcast %cst_18 : f32 to vector<2x8x1xf32>
    %43 = vector.broadcast %cst_19 : f32 to vector<2x8x1xf32>
    %44 = arith.select %25, %42, %43 : vector<2x8x1xi1>, vector<2x8x1xf32>
    %cst_20 = arith.constant dense<0.000000e+00> : vector<2x1xf32>
    %45 = vector.multi_reduction <add>, %44, %cst_20 [1] : vector<2x8x1xf32> to vector<2x1xf32>
    %46 = vector.shape_cast %45 : vector<2x1xf32> to vector<2x1x1xf32>
    %47 = tpu.iota {dimensions = array<i32: 1>} : vector<2x8x128xi32>
    %c0_i32 = arith.constant 0 : i32
    %48 = vector.broadcast %c0_i32 : i32 to vector<2x8x128xi32>
    %49 = arith.cmpi eq, %47, %48 : vector<2x8x128xi32>
    %c1_i32 = arith.constant 1 : i32
    %50 = vector.broadcast %c1_i32 : i32 to vector<2x8x128xi32>
    %51 = arith.cmpi eq, %47, %50 : vector<2x8x128xi32>
    %c2_i32 = arith.constant 2 : i32
    %52 = vector.broadcast %c2_i32 : i32 to vector<2x8x128xi32>
    %53 = arith.cmpi eq, %47, %52 : vector<2x8x128xi32>
    %c3_i32 = arith.constant 3 : i32
    %54 = vector.broadcast %c3_i32 : i32 to vector<2x8x128xi32>
    %55 = arith.cmpi eq, %47, %54 : vector<2x8x128xi32>
    %cst_21 = arith.constant 0.000000e+00 : f32
    %56 = vector.shape_cast %46 : vector<2x1x1xf32> to vector<2x1x1xf32>
    %57 = vector.broadcast %56 : vector<2x1x1xf32> to vector<2x8x128xf32>
    %58 = vector.broadcast %cst_21 : f32 to vector<2x8x128xf32>
    %59 = arith.select %55, %57, %58 : vector<2x8x128xi1>, vector<2x8x128xf32>
    %60 = vector.shape_cast %41 : vector<2x1x1xf32> to vector<2x1x1xf32>
    %61 = vector.broadcast %60 : vector<2x1x1xf32> to vector<2x8x128xf32>
    %62 = arith.select %53, %61, %59 : vector<2x8x128xi1>, vector<2x8x128xf32>
    %63 = vector.shape_cast %35 : vector<2x1x1xf32> to vector<2x1x1xf32>
    %64 = vector.broadcast %63 : vector<2x1x1xf32> to vector<2x8x128xf32>
    %65 = arith.select %51, %64, %62 : vector<2x8x128xi1>, vector<2x8x128xf32>
    %66 = vector.shape_cast %33 : vector<2x1x1xf32> to vector<2x1x1xf32>
    %67 = vector.broadcast %66 : vector<2x1x1xf32> to vector<2x8x128xf32>
    %68 = arith.select %49, %67, %65 : vector<2x8x128xi1>, vector<2x8x128xf32>
    %c0_22 = arith.constant 0 : index
    %c0_23 = arith.constant 0 : index
    %c0_24 = arith.constant 0 : index
    %69 = vector.load %arg4[%c0_22, %c0_23, %c0_24] : memref<2x8x128xf32, #tpu.memory_space<vmem>>, vector<2x8x128xf32>
    tpu.vector_store %arg4[%c0_22, %c0_23, %c0_24], %68 {strides = array<i32>} : memref<2x8x128xf32, #tpu.memory_space<vmem>>, vector<2x8x128xf32>,
    return
  }
  func.func @transform_0(%arg0: i32, %arg1: i32) -> (i32, i32, i32) {
    %c0_i32 = arith.constant 0 : i32
    %c0_i32_0 = arith.constant 0 : i32
    return %arg0, %arg1, %c0_i32 : i32, i32, i32
  }
  func.func @transform_1(%arg0: i32, %arg1: i32) -> (i32, i32, i32) {
    %c0_i32 = arith.constant 0 : i32
    %c0_i32_0 = arith.constant 0 : i32
    return %arg0, %arg1, %c0_i32 : i32, i32, i32
  }
  func.func @transform_2(%arg0: i32, %arg1: i32) -> (i32, i32, i32) {
    %c0_i32 = arith.constant 0 : i32
    %c0_i32_0 = arith.constant 0 : i32
    return %arg0, %arg1, %c0_i32 : i32, i32, i32
  }
}

</mosaic_0001>

<llo_original>
// kernel: tpu_custom_call.1
$region0: #{tpu_custom_call.1}
  #allocation0 [shape = 'u32[]', space=smem, size = 0x4, offset = 0x4, fixed_abs, tag = 'smem constant byte address 0x4 - core index']
  #allocation1 [shape = 'u32[144,128]{1,0:T(1,128)}', space=vmem, size = 0x12000, scoped, tag = 'internal scratch']
  %s0 = inlined_call_operand.vmem [shape: f32[2,8,5], index: 0, kind: input, shape index: {}]
  %s1 = inlined_call_operand.vmem [shape: s32[2,8,1], index: 1, kind: input, shape index: {}]
  %s2 = inlined_call_operand.hbm [shape: f32[2,8,128], index: 2, kind: output, shape index: {}]
  %s3 = sld [smem:[#allocation0]]
  $region18: #{tpu_custom_call.1} parent=0
    _
  %s5 = ssub.s32 1, %s3
  %s6 = scalar_select 0, %s5, %s3
  $region1: #{tpu_custom_call.1} parent=0
    #allocation2 [shape = 'u8[8192]{0}', space=vmem, size = 0x2000, scoped, tag = 'output window, operand 0, single buffered']
    #allocation3 [shape = 's32[1]{0}', space=sflag, size = 0x4, scoped, tag = 'scoped memory for tpu_custom_call.1']
    %7 = vsyncpa [#allocation3], 0
    // Predicated region
    $region2: #{tpu_custom_call.1} parent=1 // pred_check
      _
    $region3: #{tpu_custom_call.1} parent=1 // pred_check_branch
      %9 = sbr.rel (0) target = $region5
    $region4: #{tpu_custom_call.1} parent=1 // pred_region
      _
    $region5: #{tpu_custom_call.1} parent=1 // pred_fallthru
      _
    // Predicated region
    $region6: #{tpu_custom_call.1} parent=1 // pred_check
      _
    $region7: #{tpu_custom_call.1} parent=1 // pred_check_branch
      %11 = sbr.rel (0) target = $region9
    $region8: #{tpu_custom_call.1} parent=1 // pred_region
      _
    $region9: #{tpu_custom_call.1} parent=1 // pred_fallthru
      _
    %v12 = vld [vmem:[%s0] sm:$0xff]
    %v13 = vld [vmem:[%s0 + $0x8] sm:$0xff]
    %v14 = vld [vmem:[%s1] sm:$0xff]
    %v15 = vld [vmem:[%s1 + $0x8] sm:$0xff]
    %v16 = vlaneseq
    %v17 = vand.u32 %v16, 127
    %vm18 = vcmp.lt.s32.totalorder %v17, 4
    %v19 = vsel %vm18, %v12, -1e+30
    %v20 = vsel %vm18, %v13, -1e+30
    %vm21 = vcmask 39936
    %v22 = vsel %vm21, %v19, -inf
    %23 = vmax.xlane.f32.xlu0 %v22
    %v24 = vpop.xlane.xlu0 %23
    %v25 = vsel %vm21, %v20, -inf
    %26 = vmax.xlane.f32.xlu0 %v25
    %v27 = vpop.xlane.xlu0 %26
    %v28 = vmax.f32 %v24, %v12
    %v29 = vmax.f32 %v27, %v13
    %31 = vset.pattern.permute.xlu0 4
    %32 = vperm.xlu0 %31, %v28
    %v33 = vpop.permute.xlu0 %32
    %36 = vset.pattern.permute.xlu0 4
    %37 = vperm.xlu0 %36, %v29
    %v38 = vpop.permute.xlu0 %37
    %v40 = vsub.f32 %v12, %v33
    %v41 = vsub.f32 %v13, %v38
    %v42 = vmul.f32 %v40, 1.442695
    %v43 = vpow.pop %v42
    %v44 = vmul.f32 %v41, 1.442695
    %v45 = vpow.pop %v44
    %v46 = vsel %vm21, %v43, 0.0
    %47 = vadd.xlane.f32.xlu0 %v46
    %v48 = vpop.xlane.xlu0 %47
    %v49 = vsel %vm21, %v45, 0.0
    %50 = vadd.xlane.f32.xlu0 %v49
    %v51 = vpop.xlane.xlu0 %50
    %v52 = vlog2.pop %v48
    %v53 = vmul.f32 %v52, 0.6931472
    %v54 = vlog2.pop %v51
    %v55 = vmul.f32 %v54, 0.6931472
    %56 = vset.pattern.permute.xlu0 0
    %57 = vperm.xlu0 %56, %v14
    %v58 = vpop.permute.xlu0 %57
    %59 = vset.pattern.permute.xlu0 0
    %60 = vperm.xlu0 %59, %v15
    %v61 = vpop.permute.xlu0 %60
    %vm62 = vcmp.eq.s32.totalorder %v17, %v58
    %vm63 = vcmp.eq.s32.totalorder %v17, %v61
    %v64 = vsel %vm62, %v40, 0.0
    %v65 = vsel %vm63, %v41, 0.0
    %v66 = vsel %vm21, %v64, 0.0
    %67 = vadd.xlane.f32.xlu0 %v66
    %v68 = vpop.xlane.xlu0 %67
    %v69 = vsel %vm21, %v65, 0.0
    %70 = vadd.xlane.f32.xlu0 %v69
    %v71 = vpop.xlane.xlu0 %70
    %v72 = vsub.f32 %v68, %v53
    %v73 = vsub.f32 %v71, %v55
    %vm74 = vcmp.eq.s32.totalorder %v14, 4
    %vm75 = vcmp.eq.s32.totalorder %v15, 4
    %v76 = vsel %vm74, 0.1, 1.0
    %v77 = vsel %vm75, 0.1, 1.0
    %v78 = vsub.f32 0.0, %v76
    %v79 = vsub.f32 0.0, %v77
    %v80 = vmul.f32 %v78, %v72
    %v81 = vmul.f32 %v79, %v73
    %vm82 = vcmask 7168
    %v83 = vsel %vm82, %v80, 0.0
    %v84 = vrot.slane %v83, 4
    %v85 = vadd.f32 %v83, %v84
    %v86 = vrot.slane %v85, 2
    %v87 = vadd.f32 %v85, %v86
    %v88 = vrot.slane %v87, 1
    %v89 = vadd.f32 %v87, %v88
    %v90 = vsel %vm82, %v81, 0.0
    %v91 = vrot.slane %v90, 4
    %v92 = vadd.f32 %v90, %v91
    %v93 = vrot.slane %v92, 2
    %v94 = vadd.f32 %v92, %v93
    %v95 = vrot.slane %v94, 1
    %v96 = vadd.f32 %v94, %v95
    %v97 = vsel %vm82, %v76, 0.0
    %v98 = vrot.slane %v97, 4
    %v99 = vadd.f32 %v97, %v98
    %v100 = vrot.slane %v99, 2
    %v101 = vadd.f32 %v99, %v100
    %v102 = vrot.slane %v101, 1
    %v103 = vadd.f32 %v101, %v102
    %v104 = vsel %vm82, %v77, 0.0
    %v105 = vrot.slane %v104, 4
    %v106 = vadd.f32 %v104, %v105
    %v107 = vrot.slane %v106, 2
    %v108 = vadd.f32 %v106, %v107
    %v109 = vrot.slane %v108, 1
    %v110 = vadd.f32 %v108, %v109
    %vm111 = vcmp.ge.f32.partialorder %v24, %v12
    %vm112 = vcmp.ge.f32.partialorder %v27, %v13
    %v113 = vsel %vm111, 1.0, 0.0
    %v114 = vsel %vm112, 1.0, 0.0
    %vm115 = vcmask 39968
    %v116 = vsel %vm115, %v113, 0.0
    %v117 = vrot.slane %v116, 4
    %v118 = vadd.f32 %v116, %v117
    %v119 = vrot.slane %v118, 2
    %v120 = vadd.f32 %v118, %v119
    %v121 = vrot.slane %v120, 1
    %v122 = vadd.f32 %v120, %v121
    %v123 = vsel %vm115, %v114, 0.0
    %v124 = vrot.slane %v123, 4
    %v125 = vadd.f32 %v123, %v124
    %v126 = vrot.slane %v125, 2
    %v127 = vadd.f32 %v125, %v126
    %v128 = vrot.slane %v127, 1
    %v129 = vadd.f32 %v127, %v128
    %v130 = vsel %vm74, 0.0, 1.0
    %v131 = vsel %vm75, 0.0, 1.0
    %v132 = vsel %vm82, %v130, 0.0
    %v133 = vrot.slane %v132, 4
    %v134 = vadd.f32 %v132, %v133
    %v135 = vrot.slane %v134, 2
    %v136 = vadd.f32 %v134, %v135
    %v137 = vrot.slane %v136, 1
    %v138 = vadd.f32 %v136, %v137
    %v139 = vsel %vm82, %v131, 0.0
    %v140 = vrot.slane %v139, 4
    %v141 = vadd.f32 %v139, %v140
    %v142 = vrot.slane %v141, 2
    %v143 = vadd.f32 %v141, %v142
    %v144 = vrot.slane %v143, 1
    %v145 = vadd.f32 %v143, %v144
    %v146 = vlaneseq
    %v147 = vshrl.u32 %v146, 7
    %vm148 = vcmp.eq.s32.totalorder %v147, 0
    %vm149 = vcmp.eq.s32.totalorder %v147, 1
    %vm150 = vcmp.eq.s32.totalorder %v147, 2
    %vm151 = vcmp.eq.s32.totalorder %v147, 3
    %153 = vset.pattern.permute.xlu0 0
    %154 = vperm.xlu0 %153, %v138
    %v155 = vpop.permute.xlu0 %154
    %158 = vset.pattern.permute.xlu0 0
    %159 = vperm.xlu0 %158, %v145
    %v160 = vpop.permute.xlu0 %159
    %v162 = vsel %vm151, %v155, 0.0
    %v163 = vsel %vm151, %v160, 0.0
    %165 = vset.pattern.permute.xlu0 4
    %166 = vperm.xlu0 %165, %v122
    %v167 = vpop.permute.xlu0 %166
    %170 = vset.pattern.permute.xlu0 4
    %171 = vperm.xlu0 %170, %v129
    %v172 = vpop.permute.xlu0 %171
    %v174 = vsel %vm150, %v167, %v162
    %v175 = vsel %vm150, %v172, %v163
    %177 = vset.pattern.permute.xlu0 0
    %178 = vperm.xlu0 %177, %v103
    %v179 = vpop.permute.xlu0 %178
    %182 = vset.pattern.permute.xlu0 0
    %183 = vperm.xlu0 %182, %v110
    %v184 = vpop.permute.xlu0 %183
    %v186 = vsel %vm149, %v179, %v174
    %v187 = vsel %vm149, %v184, %v175
    %189 = vset.pattern.permute.xlu0 0
    %190 = vperm.xlu0 %189, %v89
    %v191 = vpop.permute.xlu0 %190
    %194 = vset.pattern.permute.xlu0 0
    %195 = vperm.xlu0 %194, %v96
    %v196 = vpop.permute.xlu0 %195
    %v198 = vsel %vm148, %v191, %v186
    %v199 = vsel %vm148, %v196, %v187
    %200 = vst [vmem:[#allocation2] sm:$0xff] %v198
    %201 = vst [vmem:[#allocation2 + $0x8] sm:$0xff] %v199
    // Predicated region
    $region10: #{tpu_custom_call.1} parent=1 // pred_check
      _
    $region11: #{tpu_custom_call.1} parent=1 // pred_check_branch
      %203 = sbr.rel (0) target = $region13
    $region12: #{tpu_custom_call.1} parent=1 // pred_region
      %s205 = ssub.s32 256, 256
      %206 = vsyncadd [#allocation3], %s205
      %s207 = sshll.u32 [#allocation2], 4
      %s208 = int_to_ptr.vmem [resolvable:$true] %s207
      %213 = dma.vmem_to_hbm [thread:$0]  %s208, 256, %s2, [#allocation3], 128, 128, 8
    $region13: #{tpu_custom_call.1} parent=1 // pred_fallthru
      _
    // Predicated region
    $region14: #{tpu_custom_call.1} parent=1 // pred_check
      _
    $region15: #{tpu_custom_call.1} parent=1 // pred_check_branch
      %215 = sbr.rel (0) target = $region17
    $region16: #{tpu_custom_call.1} parent=1 // pred_region
      %216 = dma.done [#allocation3], 256
    $region17: #{tpu_custom_call.1} parent=1 // pred_fallthru
      _
    %217 = vsyncpa [#allocation3], 1

</llo_original>
